<compile_context>
chip_gen: v7x
topology: tpu7x:2x2x1
jax: 0.10.0
libtpu: 0.0.40
codegen_flags: <defaults>
</compile_context>

<pallas_src>
import functools
import math

import jax
import jax.numpy as jnp
import numpy as np
from jax import lax
from jax.experimental import pallas as pl
from jax.experimental.pallas import tpu as pltpu


def _round_up(x, m):
    return ((x + m - 1) // m) * m


def _pick_tile(dim, target, align):
    """Largest tile <= target that divides `dim` and is a multiple of `align`.
    Falls back to the full dimension (a full-extent block is always legal)."""
    if dim <= target:
        return dim
    t = (target // align) * align
    while t >= align:
        if dim % t == 0:
            return t
        t -= align
    return dim


def _compute_vmem_limit():
    # ~3/4 of physical VMEM, capped at 100 MiB: ~96 MiB on v5e/v6e (128 MiB),
    # ~48 MiB on v7x (64 MiB physical). Conservative fallback if query fails.
    try:
        cap = int(pltpu.get_tpu_info().vmem_capacity_bytes)
        return min((cap * 3) // 4, 100 * 1024 * 1024)
    except Exception:
        return 32 * 1024 * 1024


_VMEM_LIMIT = _compute_vmem_limit()
_NEG = -1e9


# ----------------------- fused LN + matmul + epilogue -----------------------

def _fused_linear_kernel(*refs, use_ln, use_res, activation, eps, nk):
    it = iter(refs)
    x_ref = next(it)
    g_ref = next(it) if use_ln else None
    be_ref = next(it) if use_ln else None
    w_ref = next(it)
    b_ref = next(it)
    r_ref = next(it) if use_res else None
    o_ref = next(it)
    acc_ref = next(it, None)            # only present when nk > 1

    if use_ln:
        # LayerNorm prologue on the row tile (K is un-tiled on this path).
        # TODO(synk): the LN is recomputed for every output-column tile j;
        # cache the normalized bf16 row tile in scratch if N/TN grows large.
        x = x_ref[...].astype(jnp.float32)
        mu = jnp.mean(x, axis=-1, keepdims=True)
        var = jnp.mean(jnp.square(x - mu), axis=-1, keepdims=True)
        x = ((x - mu) * lax.rsqrt(var + eps) * g_ref[...] + be_ref[...]
             ).astype(jnp.bfloat16)
    else:
        x = x_ref[...].astype(jnp.bfloat16)

    # bf16 MXU operands, f32 accumulation.
    part = jnp.dot(x, w_ref[...], preferred_element_type=jnp.float32)

    def _epilogue(y):
        y = y + b_ref[...]
        if activation == "relu":
            y = jnp.maximum(y, 0.0)
        elif activation == "gelu":
            # TODO(synk): tanh-approx GELU; switch to erf form if the reference
            # model used torch.nn.GELU (erf) semantics.
            c = math.sqrt(2.0 / math.pi)
            y = 0.5 * y * (1.0 + jnp.tanh(c * (y + 0.044715 * y * y * y)))
        if use_res:
            y = y + r_ref[...].astype(jnp.float32)
        return y.astype(o_ref.dtype)

    if nk == 1:
        # Fast path: single-iteration reduction -> no accumulator scratch.
        o_ref[...] = _epilogue(part)
    else:
        k = pl.program_id(2)

        @pl.when(k == 0)
        def _():
            acc_ref[...] = jnp.zeros_like(acc_ref)

        acc_ref[...] += part

        @pl.when(k == nk - 1)
        def _():
            o_ref[...] = _epilogue(acc_ref[...])


def fused_linear(x, w, b, *, ln=None, activation=None, residual=None,
                 eps=1e-5, out_dtype=jnp.float32, tm=512, tn=1024, tk=2048):
    """y = act(LayerNorm?(x) @ w + b) (+ residual), tiled (TM, TN, TK).

    x: (..., K) f32/bf16, w: (K, N) bf16 (pre-cast at init), b: (1, N) f32,
    ln: optional (gamma, beta) each (1, K) f32, residual: optional (..., N).
    """
    lead = x.shape[:-1]
    K = x.shape[-1]
    N = w.shape[1]
    M = int(np.prod(lead))
    x2 = x.reshape(M, K)
    r2 = residual.reshape(M, N) if residual is not None else None

    # Pad rows so the tile always divides M (never fall back to a full-M block).
    Mp = _round_up(M, 16)
    if Mp != M:
        x2 = jnp.pad(x2, ((0, Mp - M), (0, 0)))
        if r2 is not None:
            r2 = jnp.pad(r2, ((0, Mp - M), (0, 0)))

    TM = _pick_tile(Mp, tm, 16)
    TN = _pick_tile(N, tn, 128)
    # LayerNorm needs the whole feature dim present in the block.
    TK = K if ln is not None else _pick_tile(K, tk, 128)
    nk = K // TK

    in_specs = [pl.BlockSpec((TM, TK), lambda i, j, k: (i, k))]
    args = [x2]
    if ln is not None:
        in_specs += [pl.BlockSpec((1, TK), lambda i, j, k: (0, k)),
                     pl.BlockSpec((1, TK), lambda i, j, k: (0, k))]
        args += [ln[0], ln[1]]
    in_specs += [pl.BlockSpec((TK, TN), lambda i, j, k: (k, j)),
                 pl.BlockSpec((1, TN), lambda i, j, k: (0, j))]
    args += [w, b]
    if residual is not None:
        in_specs.append(pl.BlockSpec((TM, TN), lambda i, j, k: (i, j)))
        args.append(r2)

    scratch = [] if nk == 1 else [pltpu.VMEM((TM, TN), jnp.float32)]

    y = pl.pallas_call(
        functools.partial(_fused_linear_kernel, use_ln=ln is not None,
                          use_res=residual is not None, activation=activation,
                          eps=eps, nk=nk),
        out_shape=jax.ShapeDtypeStruct((Mp, N), out_dtype),
        grid=(Mp // TM, N // TN, nk),
        in_specs=in_specs,
        out_specs=pl.BlockSpec((TM, TN), lambda i, j, k: (i, j)),
        scratch_shapes=scratch,
        compiler_params=pltpu.CompilerParams(
            dimension_semantics=("parallel", "parallel", "arbitrary"),
            vmem_limit_bytes=_VMEM_LIMIT),
    )(*args)
    if Mp != M:
        y = y[:M]
    return y.reshape(lead + (N,))


# ------------------------------ attention kernels ------------------------------
# Softmax math stays f32 (v5e has no bf16 VPU/EUP); matmul operands are bf16.
# The 1/sqrt(head_dim) scale is folded into Wq at init.
# TODO(synk): per-head column slices are 32/64 lanes wide; repacking heads to
# 128-lane-aligned groups would remove the in-kernel relayouts.


def _self_attn_kernel(q_ref, k_ref, v_ref, kb_ref, o_ref,
                      m_sc, l_sc, acc_sc, *, heads, head_dim, tq, tk):
    qi = pl.program_id(1)
    ki = pl.program_id(2)
    nk = pl.num_programs(2)

    @pl.when(ki == 0)
    def _():
        m_sc[...] = jnp.full_like(m_sc, -jnp.inf)
        l_sc[...] = jnp.zeros_like(l_sc)
        acc_sc[...] = jnp.zeros_like(acc_sc)

    # Skip key tiles strictly in the causal future of every query row here.
    @pl.when(ki * tk <= qi * tq + (tq - 1))
    def _():
        # Causal mask built in-kernel (no (T,T) bias in HBM) + key-padding bias.
        row = qi * tq + lax.broadcasted_iota(jnp.int32, (tq, tk), 0)
        col = ki * tk + lax.broadcasted_iota(jnp.int32, (tq, tk), 1)
        bias = jnp.where(row >= col, 0.0, _NEG).astype(jnp.float32) + kb_ref[0]

        for h in range(heads):
            lo = h * head_dim
            hi = lo + head_dim
            q = q_ref[0, :, lo:hi]                      # (tq, hd) bf16
            k = k_ref[0, :, lo:hi]                      # (tk, hd) bf16
            v = v_ref[0, :, lo:hi]                      # (tk, hd) bf16
            s = jnp.dot(q, k.T, preferred_element_type=jnp.float32) + bias
            m_prev = m_sc[h]                            # (tq, 1)
            m_new = jnp.maximum(m_prev, jnp.max(s, axis=-1, keepdims=True))
            a = jnp.exp(m_prev - m_new)
            p = jnp.exp(s - m_new)
            l_sc[h] = a * l_sc[h] + jnp.sum(p, axis=-1, keepdims=True)
            acc_sc[h] = a * acc_sc[h] + jnp.dot(
                p.astype(jnp.bfloat16), v, preferred_element_type=jnp.float32)
            m_sc[h] = m_new

    @pl.when(ki == nk - 1)
    def _():
        for h in range(heads):
            lo = h * head_dim
            hi = lo + head_dim
            o_ref[0, :, lo:hi] = (
                acc_sc[h] * pl.reciprocal(l_sc[h], approx=True)
            ).astype(o_ref.dtype)


def self_attention(qkv, key_bias, heads, *, tq=256, tkk=512):
    """qkv: (B, T, 3E) bf16 packed [q|k|v]; key_bias: (B, 1, T) additive f32."""
    B, T, three_e = qkv.shape
    E = three_e // 3
    head_dim = E // heads
    TQ = _pick_tile(T, tq, 16)
    TK = _pick_tile(T, tkk, 128)
    kernel = functools.partial(_self_attn_kernel, heads=heads,
                               head_dim=head_dim, tq=TQ, tk=TK)
    return pl.pallas_call(
        kernel,
        out_shape=jax.ShapeDtypeStruct((B, T, E), qkv.dtype),
        grid=(B, T // TQ, T // TK),
        in_specs=[
            # same packed array passed 3x; the block index along the last axis
            # selects the q / k / v slab without any HBM copy
            pl.BlockSpec((1, TQ, E), lambda b, qi, ki: (b, qi, 0)),
            pl.BlockSpec((1, TK, E), lambda b, qi, ki: (b, ki, 1)),
            pl.BlockSpec((1, TK, E), lambda b, qi, ki: (b, ki, 2)),
            pl.BlockSpec((1, 1, TK), lambda b, qi, ki: (b, 0, ki)),
        ],
        out_specs=pl.BlockSpec((1, TQ, E), lambda b, qi, ki: (b, qi, 0)),
        scratch_shapes=[pltpu.VMEM((heads, TQ, 1), jnp.float32),
                        pltpu.VMEM((heads, TQ, 1), jnp.float32),
                        pltpu.VMEM((heads, TQ, head_dim), jnp.float32)],
        compiler_params=pltpu.CompilerParams(
            dimension_semantics=("parallel", "parallel", "arbitrary"),
            vmem_limit_bytes=_VMEM_LIMIT),
    )(qkv, qkv, qkv, key_bias)


def _cross_attn_kernel(q_ref, k_ref, v_ref, kb_ref, o_ref, attn_ref,
                       *, heads, head_dim):
    bias = kb_ref[0]                                    # (1, Tk) f32
    for h in range(heads):
        lo = h * head_dim
        hi = lo + head_dim
        q = q_ref[0, :, lo:hi]                          # (tq, hd) bf16
        k = k_ref[0, :, lo:hi]                          # (Tk, hd) bf16
        v = v_ref[0, :, lo:hi]                          # (Tk, hd) bf16
        s = jnp.dot(q, k.T, preferred_element_type=jnp.float32) + bias
        s = s - jnp.max(s, axis=-1, keepdims=True)
        p = jnp.exp(s)
        p = p / jnp.sum(p, axis=-1, keepdims=True)      # exact: probs are returned
        attn_ref[0, h] = p
        o_ref[0, :, lo:hi] = jnp.dot(
            p.astype(jnp.bfloat16), v,
            preferred_element_type=jnp.float32).astype(o_ref.dtype)


def cross_attention(q, kv, key_bias, heads, *, tq=256):
    """q: (B, T, E) bf16; kv: (B, Tk, 2E) bf16 packed [k|v];
    key_bias: (B, 1, Tk) additive f32. Returns (out bf16, attn f32)."""
    B, T, E = q.shape
    Tk = kv.shape[1]
    head_dim = E // heads
    TQ = _pick_tile(T, tq, 16)
    kernel = functools.partial(_cross_attn_kernel, heads=heads,
                               head_dim=head_dim)
    out, attn = pl.pallas_call(
        kernel,
        out_shape=(jax.ShapeDtypeStruct((B, T, E), q.dtype),
                   jax.ShapeDtypeStruct((B, heads, T, Tk), jnp.float32)),
        grid=(B, T // TQ),
        in_specs=[
            pl.BlockSpec((1, TQ, E), lambda b, qi: (b, qi, 0)),
            pl.BlockSpec((1, Tk, E), lambda b, qi: (b, 0, 0)),   # k slab
            pl.BlockSpec((1, Tk, E), lambda b, qi: (b, 0, 1)),   # v slab
            pl.BlockSpec((1, 1, Tk), lambda b, qi: (b, 0, 0)),
        ],
        out_specs=(pl.BlockSpec((1, TQ, E), lambda b, qi: (b, qi, 0)),
                   # 4-D block -> 4 block indices (this was the previous bug)
                   pl.BlockSpec((1, heads, TQ, Tk),
                                lambda b, qi: (b, 0, qi, 0))),
        compiler_params=pltpu.CompilerParams(
            dimension_semantics=("parallel", "parallel"),
            vmem_limit_bytes=_VMEM_LIMIT),
    )(q, kv, kv, key_bias)
    return out, attn


# ------------------------------- model glue -------------------------------

def sinusoidal_pe(max_len, dim):
    pos = np.arange(max_len)[:, None].astype(np.float32)
    i = np.arange(dim)[None, :]
    angle = pos / np.power(10000.0, (2 * (i // 2)) / dim)
    pe = np.where(i % 2 == 0, np.sin(angle), np.cos(angle))
    return jnp.asarray(pe, dtype=jnp.float32)


def decoder_forward(params, mel_in, keys, key_padding_mask=None, input_mask=None):
    """mel_in: (B, T, num_mel), keys: (B, Tk, E). Masks: True = valid position."""
    B, T, _ = mel_in.shape
    Tk = keys.shape[1]
    heads = params["heads"]
    num_mel = params["num_mel"]

    # --- DecoderPreNet: (Linear -> ReLU -> Dropout) x2 ; dropout is eval identity ---
    x = fused_linear(mel_in, params["prenet"]["w1"], params["prenet"]["b1"],
                     activation="relu")
    x = fused_linear(x, params["prenet"]["w2"], params["prenet"]["b2"],
                     activation="relu")

    # --- ScaledPositionalEncoding: x + alpha * pe ; dropout is eval identity ---
    x = x + params["pe_alpha"] * params["pe"][:T][None, :, :]

    # --- masks -> tiny additive key biases (causal part built in-kernel) ---
    if input_mask is None:
        input_mask = jnp.ones((B, T), dtype=bool)
    if key_padding_mask is None:
        key_padding_mask = jnp.ones((B, Tk), dtype=bool)
    self_kbias = jnp.where(input_mask, 0.0, _NEG).astype(jnp.float32)[:, None, :]
    cross_kbias = jnp.where(key_padding_mask, 0.0, _NEG).astype(jnp.float32)[:, None, :]

    # --- Reformer decoder stack ---
    # TODO(synk): LSH-bucketed attention + reversible residuals of the original
    # Reformer are approximated with exact causal attention + standard residuals.
    attn_mats = []
    for layer in params["layers"]:
        # self attention: LN1 fused into the packed QKV projection (scale in Wq)
        qkv = fused_linear(x, layer["w_qkv"], layer["b_qkv"],
                           ln=(layer["ln1_g"], layer["ln1_b"]),
                           out_dtype=jnp.bfloat16)
        sa = self_attention(qkv, self_kbias, heads)
        x = fused_linear(sa, layer["w_so"], layer["b_so"], residual=x)

        # cross attention: LN2 fused into the Q projection; K/V packed
        q = fused_linear(x, layer["w_cq"], layer["b_cq"],
                         ln=(layer["ln2_g"], layer["ln2_b"]),
                         out_dtype=jnp.bfloat16)
        kv = fused_linear(keys, layer["w_ckv"], layer["b_ckv"],
                          out_dtype=jnp.bfloat16)
        ca, attn = cross_attention(q, kv, cross_kbias, heads)
        attn_mats.append(attn)
        x = fused_linear(ca, layer["w_co"], layer["b_co"], residual=x)

        # feed forward: LN3 + GELU fused into matmul 1, residual into matmul 2
        h = fused_linear(x, layer["ff_w1"], layer["ff_b1"],
                         ln=(layer["ln3_g"], layer["ln3_b"]), activation="gelu",
                         out_dtype=jnp.bfloat16)
        x = fused_linear(h, layer["ff_w2"], layer["ff_b2"], residual=x)

    # --- mel + stop heads: one lane-padded (E, 128k) matmul, sliced afterwards ---
    heads_out = fused_linear(x, params["w_heads"], params["b_heads"])
    mel = heads_out[..., :num_mel]                       # (B, T, num_mel)
    stop = heads_out[..., num_mel:num_mel + 1]           # (B, T, 1)
    attention_matrices = jnp.stack(attn_mats, axis=0)    # (depth, B, H, T, Tk)
    return mel, stop, attention_matrices


def init_params(key, num_mel, emb, prenet_hidden, depth, heads, ff_mult, max_len):
    head_dim = emb // heads
    scale = 1.0 / math.sqrt(head_dim)
    n_lin = 2 + depth * 10 + 2
    ki = iter(jax.random.split(key, n_lin))

    def lin(kin, kout):
        w = jax.random.normal(next(ki), (kin, kout), jnp.float32) / math.sqrt(kin)
        b = jnp.zeros((kout,), jnp.float32)
        return w, b

    def pack_w(*ws):
        # weights are stored in bf16 once, at init (MXU operand dtype)
        return jnp.concatenate(ws, axis=1).astype(jnp.bfloat16)

    def pack_b(*bs):
        return jnp.concatenate(bs, axis=0).reshape(1, -1).astype(jnp.float32)

    params = {"heads": heads, "num_mel": num_mel}
    w1, b1 = lin(num_mel, prenet_hidden)
    w2, b2 = lin(prenet_hidden, emb)
    params["prenet"] = {"w1": pack_w(w1), "b1": pack_b(b1),
                        "w2": pack_w(w2), "b2": pack_b(b2)}
    params["pe"] = sinusoidal_pe(max_len, emb)
    params["pe_alpha"] = jnp.float32(1.0)   # nn.Parameter(torch.ones(1))

    layers = []
    for _ in range(depth):
        layer = {}
        # self attention: pack [Wq*scale | Wk | Wv] -> one (E, 3E) matmul
        wq, bq = lin(emb, emb)
        wk, bk = lin(emb, emb)
        wv, bv = lin(emb, emb)
        wo, bo = lin(emb, emb)
        layer["w_qkv"] = pack_w(wq * scale, wk, wv)
        layer["b_qkv"] = pack_b(bq * scale, bk, bv)
        layer["w_so"] = pack_w(wo)
        layer["b_so"] = pack_b(bo)
        # cross attention: Q alone (scale folded), K/V packed -> (E, 2E)
        wq, bq = lin(emb, emb)
        wk, bk = lin(emb, emb)
        wv, bv = lin(emb, emb)
        wo, bo = lin(emb, emb)
        layer["w_cq"] = pack_w(wq * scale)
        layer["b_cq"] = pack_b(bq * scale)
        layer["w_ckv"] = pack_w(wk, wv)
        layer["b_ckv"] = pack_b(bk, bv)
        layer["w_co"] = pack_w(wo)
        layer["b_co"] = pack_b(bo)
        # feed forward
        fw1, fb1 = lin(emb, emb * ff_mult)
        fw2, fb2 = lin(emb * ff_mult, emb)
        layer["ff_w1"] = pack_w(fw1)
        layer["ff_b1"] = pack_b(fb1)
        layer["ff_w2"] = pack_w(fw2)
        layer["ff_b2"] = pack_b(fb2)
        for i in (1, 2, 3):
            layer[f"ln{i}_g"] = jnp.ones((1, emb), jnp.float32)
            layer[f"ln{i}_b"] = jnp.zeros((1, emb), jnp.float32)
        layers.append(layer)
    params["layers"] = layers

    # mel + stop heads fused and zero-padded to a 128-lane output
    mel_w, mel_b = lin(emb, num_mel)
    stop_w, stop_b = lin(emb, 1)
    n_heads_out = max(128, _round_up(num_mel + 1, 128))
    pad = n_heads_out - (num_mel + 1)
    w_pad = jnp.zeros((emb, pad), jnp.float32)
    b_pad = jnp.zeros((pad,), jnp.float32)
    params["w_heads"] = pack_w(mel_w, stop_w, w_pad)   # (E, 128k)
    params["b_heads"] = pack_b(mel_b, stop_b, b_pad)
    return params


if __name__ == "__main__":
    num_mel = 8
    emb = 128
    prenet_hidden = 128
    depth = 2
    heads = 4
    ff_mult = 2
    B, T, Tk = 2, 16, 16

    root = jax.random.PRNGKey(0)
    k_params, k_mel, k_keys = jax.random.split(root, 3)
    params = init_params(k_params, num_mel, emb, prenet_hidden, depth, heads,
                         ff_mult, max_len=64)

    mel_in = jax.random.normal(k_mel, (B, T, num_mel), jnp.float32)
    enc_keys = jax.random.normal(k_keys, (B, Tk, emb), jnp.float32)
    key_padding_mask = jnp.ones((B, Tk), dtype=bool).at[1, -2:].set(False)  # True = valid
    input_mask = jnp.ones((B, T), dtype=bool)

    mel, stop, attn = decoder_forward(params, mel_in, enc_keys,
                                      key_padding_mask=key_padding_mask,
                                      input_mask=input_mask)
    jax.block_until_ready((mel, stop, attn))
    assert mel.shape == (B, T, num_mel)
    assert stop.shape == (B, T, 1)
    assert attn.shape == (depth, B, heads, T, Tk)
    assert bool(jnp.all(jnp.isfinite(mel))) and bool(jnp.all(jnp.isfinite(stop)))
    assert bool(jnp.all(jnp.isfinite(attn)))
    print("KERNEL_OK")
</pallas_src>

<mosaic_0001>
module attributes {stable_mosaic.version = 11 : i64} {
  func.func @_fused_linear_kernel(%arg0: i32, %arg1: i32, %arg2: i32, %arg3: memref<32x8xf32, #tpu.memory_space<vmem>>, %arg4: memref<8x128xbf16, #tpu.memory_space<vmem>>, %arg5: memref<1x128xf32, #tpu.memory_space<vmem>>, %arg6: memref<32x128xf32, #tpu.memory_space<vmem>>) attributes {dimension_semantics = [#tpu.dimension_semantics<parallel>, #tpu.dimension_semantics<parallel>, #tpu.dimension_semantics<arbitrary>], iteration_bounds = array<i64: 1, 1, 1>, scalar_prefetch = 0 : i64, scratch_operands = 0 : i64, tpu.core_type = #tpu.core_type<tc>, window_params = [{transform_indices = @transform_0, window_bounds = array<i64: 32, 8>}, {transform_indices = @transform_1, window_bounds = array<i64: 8, 128>}, {transform_indices = @transform_2, window_bounds = array<i64: 1, 128>}, {transform_indices = @transform_3, window_bounds = array<i64: 32, 128>}]} {
    %c0 = arith.constant 0 : index
    %c0_0 = arith.constant 0 : index
    %0 = vector.load %arg3[%c0, %c0_0] : memref<32x8xf32, #tpu.memory_space<vmem>>, vector<32x8xf32>
    %1 = arith.truncf %0 : vector<32x8xf32> to vector<32x8xbf16>
    %c0_1 = arith.constant 0 : index
    %c0_2 = arith.constant 0 : index
    %2 = vector.load %arg4[%c0_1, %c0_2] : memref<8x128xbf16, #tpu.memory_space<vmem>>, vector<8x128xbf16>
    %cst = arith.constant dense<0.000000e+00> : vector<32x128xf32>
    %3 = tpu.matmul %1, %2, %cst {dimension_numbers = #tpu.dot_dimension_numbers<[1], [0], [0], [1], [0, 0, 1, 1], [], []>} : vector<32x8xbf16>, vector<8x128xbf16>, vector<32x128xf32> -> vector<32x128xf32>
    %c0_3 = arith.constant 0 : index
    %c0_4 = arith.constant 0 : index
    %4 = vector.load %arg5[%c0_3, %c0_4] : memref<1x128xf32, #tpu.memory_space<vmem>>, vector<1x128xf32>
    %5 = vector.broadcast %4 : vector<1x128xf32> to vector<32x128xf32>
    %6 = arith.addf %3, %5 : vector<32x128xf32>
    %cst_5 = arith.constant 0.000000e+00 : f32
    %7 = vector.broadcast %cst_5 : f32 to vector<32x128xf32>
    %8 = arith.maximumf %6, %7 : vector<32x128xf32>
    %c0_6 = arith.constant 0 : index
    %c0_7 = arith.constant 0 : index
    %9 = vector.load %arg6[%c0_6, %c0_7] : memref<32x128xf32, #tpu.memory_space<vmem>>, vector<32x128xf32>
    tpu.vector_store %arg6[%c0_6, %c0_7], %8 {strides = array<i32>} : memref<32x128xf32, #tpu.memory_space<vmem>>, vector<32x128xf32>,
    return
  }
  func.func @transform_0(%arg0: i32, %arg1: i32, %arg2: i32) -> (i32, i32) {
    %c0_i32 = arith.constant 0 : i32
    return %arg0, %arg2 : i32, i32
  }
  func.func @transform_1(%arg0: i32, %arg1: i32, %arg2: i32) -> (i32, i32) {
    %c0_i32 = arith.constant 0 : i32
    return %arg2, %arg1 : i32, i32
  }
  func.func @transform_2(%arg0: i32, %arg1: i32, %arg2: i32) -> (i32, i32) {
    %c0_i32 = arith.constant 0 : i32
    %c0_i32_0 = arith.constant 0 : i32
    return %c0_i32, %arg1 : i32, i32
  }
  func.func @transform_3(%arg0: i32, %arg1: i32, %arg2: i32) -> (i32, i32) {
    %c0_i32 = arith.constant 0 : i32
    return %arg0, %arg1 : i32, i32
  }
}

</mosaic_0001>

<llo_original>
// kernel: tpu_custom_call.1
$region0: #{tpu_custom_call.1}
  #allocation0 [shape = 'u32[]', space=smem, size = 0x4, offset = 0x4, fixed_abs, tag = 'smem constant byte address 0x4 - core index']
  #allocation1 [shape = 'u32[144,128]{1,0:T(1,128)}', space=vmem, size = 0x12000, scoped, tag = 'internal scratch']
  %s0 = inlined_call_operand.vmem [shape: f32[32,8], index: 0, kind: input, shape index: {}]
  %s1 = inlined_call_operand.vmem [shape: bf16[8,128], index: 1, kind: input, shape index: {}]
  %s2 = inlined_call_operand.vmem [shape: f32[1,128], index: 2, kind: input, shape index: {}]
  %s3 = inlined_call_operand.hbm [shape: f32[32,128], index: 3, kind: output, shape index: {}]
  %s4 = sld [smem:[#allocation0]]
  $region22: #{tpu_custom_call.1} parent=0
    _
  %s6 = ssub.s32 1, %s4
  %s7 = scalar_select 0, %s6, %s4
  $region1: #{tpu_custom_call.1} parent=0
    #allocation2 [shape = 'u8[16384]{0}', space=vmem, size = 0x4000, scoped, tag = 'output window, operand 0, single buffered']
    #allocation3 [shape = 's32[1]{0}', space=sflag, size = 0x4, scoped, tag = 'scoped memory for tpu_custom_call.1']
    %8 = vsyncpa [#allocation3], 0
    // Predicated region
    $region2: #{tpu_custom_call.1} parent=1 // pred_check
      _
    $region3: #{tpu_custom_call.1} parent=1 // pred_check_branch
      %10 = sbr.rel (0) target = $region5
    $region4: #{tpu_custom_call.1} parent=1 // pred_region
      _
    $region5: #{tpu_custom_call.1} parent=1 // pred_fallthru
      _
    // Predicated region
    $region6: #{tpu_custom_call.1} parent=1 // pred_check
      _
    $region7: #{tpu_custom_call.1} parent=1 // pred_check_branch
      %12 = sbr.rel (0) target = $region9
    $region8: #{tpu_custom_call.1} parent=1 // pred_region
      _
    $region9: #{tpu_custom_call.1} parent=1 // pred_fallthru
      _
    // Predicated region
    $region10: #{tpu_custom_call.1} parent=1 // pred_check
      _
    $region11: #{tpu_custom_call.1} parent=1 // pred_check_branch
      %14 = sbr.rel (0) target = $region13
    $region12: #{tpu_custom_call.1} parent=1 // pred_region
      _
    $region13: #{tpu_custom_call.1} parent=1 // pred_fallthru
      _
    %v16 = vld [vmem:[%s0] sm:$0xff]
    %v17 = vld [vmem:[%s0 + $0x8] sm:$0xff]
    %v18 = vld [vmem:[%s0 + $0x10] sm:$0xff]
    %v19 = vld [vmem:[%s0 + $0x18] sm:$0xff]
    %v20 = vpack.c.bf16 %v17, %v16
    %v21 = vpack.c.bf16 %v19, %v18
    %v22 = vld [vmem:[%s1] sm:$0xf]
    %v23 = vld [vmem:[%s2] sm:$0x1]
    %v25 = vlaneseq
    %v26 = vshrl.u32 %v25, 7
    %v27 = vsub.s32 0, %v26
    %v28 = vrot.slane %v23, %v27
    %vm30 = vcmask 64512
    %v32 = vsel %vm30, %v20, 0
    %v35 = vsel %vm30, %v21, 0
    %vm37 = vcmask 1043456
    %v39 = vsel %vm37, %v22, 0
    %41 = vmatprep.subr.bf16.mxu0 0
    %42 = vmatpush1.bf16.msra.mxu0 %v39
    %43 = vmatprep.subr.bf16.mxu0 0
    %44 = vmatpush1.bf16.msra.mxu0 0
    %45 = vmatprep.subr.bf16.mxu0 0
    %46 = vmatpush1.bf16.msra.mxu0 0
    %47 = vmatprep.subr.bf16.mxu0 0
    %48 = vmatpush1.bf16.msra.mxu0 0
    %49 = vmatprep.subr.bf16.mxu0 0
    %50 = vmatpush1.bf16.msra.mxu0 0
    %51 = vmatprep.subr.bf16.mxu0 0
    %52 = vmatpush1.bf16.msra.mxu0 0
    %53 = vmatprep.subr.bf16.mxu0 0
    %54 = vmatpush1.bf16.msra.mxu0 0
    %55 = vmatprep.subr.bf16.mxu0 0
    %56 = vmatpush1.bf16.msra.mxu0 0
    %57 = vmatprep.subr.bf16.mxu0 0
    %58 = vmatpush1.bf16.msra.mxu0 0
    %59 = vmatprep.subr.bf16.mxu0 0
    %60 = vmatpush1.bf16.msra.mxu0 0
    %61 = vmatprep.subr.bf16.mxu0 0
    %62 = vmatpush1.bf16.msra.mxu0 0
    %63 = vmatprep.subr.bf16.mxu0 0
    %64 = vmatpush1.bf16.msra.mxu0 0
    %65 = vmatprep.subr.bf16.mxu0 0
    %66 = vmatpush1.bf16.msra.mxu0 0
    %67 = vmatprep.subr.bf16.mxu0 0
    %68 = vmatpush1.bf16.msra.mxu0 0
    %69 = vmatprep.subr.bf16.mxu0 0
    %70 = vmatpush1.bf16.msra.mxu0 0
    %71 = vmatprep.subr.bf16.mxu0 0
    %72 = vmatpush1.bf16.msra.mxu0 0
    %73 = vmatprep.mubr.bf16.mxu0 0
    %74 = vmatmul.mubr.bf16.gmra.mrb[0].mxu0 %v32
    %v75 = vpop.f32.mrb[0].mxu0
    %v76 = vadd.f32 %v28, %v75
    %v77 = vpop.f32.mrb[0].mxu0
    %v78 = vpop.f32.mrb[0].mxu0
    %v79 = vadd.f32 %v28, %v78
    %v80 = vpop.f32.mrb[0].mxu0
    %81 = vmatprep.mubr.bf16.mxu0 0
    %82 = vmatmul.mubr.bf16.gmra.mrb[0].mxu0 %v35
    %v83 = vpop.f32.mrb[0].mxu0
    %v84 = vadd.f32 %v28, %v83
    %v85 = vpop.f32.mrb[0].mxu0
    %v86 = vpop.f32.mrb[0].mxu0
    %v87 = vadd.f32 %v28, %v86
    %v88 = vpop.f32.mrb[0].mxu0
    %89 = vdwg.mxu0
    %v90 = vmax.f32 %v76, 0.0
    %v91 = vmax.f32 %v79, 0.0
    %v92 = vmax.f32 %v84, 0.0
    %v93 = vmax.f32 %v87, 0.0
    %94 = vst [vmem:[#allocation2] sm:$0xff] %v90
    %95 = vst [vmem:[#allocation2 + $0x8] sm:$0xff] %v91
    %96 = vst [vmem:[#allocation2 + $0x10] sm:$0xff] %v92
    %97 = vst [vmem:[#allocation2 + $0x18] sm:$0xff] %v93
    // Predicated region
    $region14: #{tpu_custom_call.1} parent=1 // pred_check
      _
    $region15: #{tpu_custom_call.1} parent=1 // pred_check_branch
      %99 = sbr.rel (0) target = $region17
    $region16: #{tpu_custom_call.1} parent=1 // pred_region
      %s101 = ssub.s32 512, 512
      %102 = vsyncadd [#allocation3], %s101
      %s103 = sshll.u32 [#allocation2], 4
      %s104 = int_to_ptr.vmem [resolvable:$true] %s103
      %109 = dma.vmem_to_hbm [thread:$0]  %s104, 512, %s3, [#allocation3], 128, 128, 8
    $region17: #{tpu_custom_call.1} parent=1 // pred_fallthru
      _
    // Predicated region
    $region18: #{tpu_custom_call.1} parent=1 // pred_check
      _
    $region19: #{tpu_custom_call.1} parent=1 // pred_check_branch
      %111 = sbr.rel (0) target = $region21
    $region20: #{tpu_custom_call.1} parent=1 // pred_region
      %112 = dma.done [#allocation3], 512
    $region21: #{tpu_custom_call.1} parent=1 // pred_fallthru
      _
    %113 = vsyncpa [#allocation3], 1

</llo_original>
